<compile_context>
chip_gen: v6e
topology: v6e:2x2x1
jax: 0.10.0
libtpu: 0.0.40
codegen_flags: <defaults>
</compile_context>

<pallas_src>
import functools

import jax
import jax.numpy as jnp
from jax.experimental import pallas as pl
from jax.experimental.pallas import tpu as pltpu


# ---------------------------------------------------------------------------
# Kernels
# ---------------------------------------------------------------------------

def _masked_avg_pool_kernel(x_ref, valid_ref, inv_len_ref, o_ref, acc_ref):
    """Masked mean over T.

    x_ref:       (tT, B, tC)  encoder output tile
    valid_ref:   (tT, B, 1)   f32, 1.0 == valid position, 0.0 == padded
    inv_len_ref: (B, 1)       f32, 1 / num_valid_positions per sequence
    o_ref:       (B, tC)      output tile (resident across the T grid axis)
    acc_ref:     (B, tC)      f32 accumulator scratch
    """
    t = pl.program_id(1)

    @pl.when(t == 0)
    def _init():
        acc_ref[...] = jnp.zeros_like(acc_ref)

    x = x_ref[...].astype(jnp.float32)                     # (tT, B, tC) f32
    # vselect with lane-broadcast mask; zeroes padded rows exactly like the
    # PyTorch in-place write (robust even to non-finite padded values).
    x = jnp.where(valid_ref[...] != 0.0, x, 0.0)
    acc_ref[...] += jnp.sum(x, axis=0)                     # (B, tC)

    @pl.when(t == pl.num_programs(1) - 1)
    def _finalize():
        o_ref[...] = (acc_ref[...] * inv_len_ref[...]).astype(o_ref.dtype)


def _mean_pool_kernel(x_ref, o_ref, acc_ref, *, inv_t):
    """Plain mean over T (padding_mask is None fast path)."""
    t = pl.program_id(1)

    @pl.when(t == 0)
    def _init():
        acc_ref[...] = jnp.zeros_like(acc_ref)

    acc_ref[...] += jnp.sum(x_ref[...].astype(jnp.float32), axis=0)

    @pl.when(t == pl.num_programs(1) - 1)
    def _finalize():
        o_ref[...] = (acc_ref[...] * inv_t).astype(o_ref.dtype)


# ---------------------------------------------------------------------------
# Wrapper
# ---------------------------------------------------------------------------

def _pick_tile(dim, target, multiple):
    """Largest divisor of `dim` that is a multiple of `multiple` and <= target.

    Falls back to the full dim if no such divisor exists (small/odd sizes).
    """
    best = None
    cand = multiple
    limit = min(dim, target)
    while cand <= limit:
        if dim % cand == 0:
            best = cand
        cand += multiple
    return best if best is not None else dim


def avg_pooler(encoder_out, padding_mask=None, *, tile_t=None, tile_c=None):
    """JAX/Pallas equivalent of AvgPooler.forward.

    encoder_out:  (T, B, C) array
    padding_mask: (T, B) bool array (True for padded positions) or None
    returns:      (B, C) array with encoder_out.dtype
    """
    T, B, C = encoder_out.shape
    itemsize = jnp.dtype(encoder_out.dtype).itemsize

    # Tile C in lane-dense multiples of 128 (up to 512); fall back to full C.
    if tile_c is None:
        tile_c = _pick_tile(C, 512, 128)
    # Tile T so an x tile is roughly <= 4 MiB (Pallas double-buffers it),
    # preferring multiples of 8; fall back to full T.
    if tile_t is None:
        row_bytes = max(B * tile_c * itemsize, 1)
        target_rows = max(8, (4 * 1024 * 1024) // row_bytes)
        tile_t = _pick_tile(T, target_rows, 8)

    assert C % tile_c == 0, "tile_c must divide C"
    assert T % tile_t == 0, "tile_t must divide T"
    grid = (C // tile_c, T // tile_t)  # C parallel, T (reduction) innermost

    compiler_params = pltpu.CompilerParams(
        dimension_semantics=("parallel", "arbitrary"),
        vmem_limit_bytes=32 * 1024 * 1024,
    )

    if padding_mask is None:
        # Mask-free fast path: no mask DMA, no select; scale by 1/T.
        kernel = functools.partial(_mean_pool_kernel, inv_t=1.0 / T)
        return pl.pallas_call(
            kernel,
            out_shape=jax.ShapeDtypeStruct((B, C), encoder_out.dtype),
            grid_spec=pltpu.PrefetchScalarGridSpec(
                num_scalar_prefetch=0,
                grid=grid,
                in_specs=[
                    pl.BlockSpec((tile_t, B, tile_c), lambda c, t: (t, 0, c)),
                ],
                out_specs=pl.BlockSpec((B, tile_c), lambda c, t: (0, c)),
                scratch_shapes=[pltpu.VMEM((B, tile_c), jnp.float32)],
            ),
            compiler_params=compiler_params,
        )(encoder_out)

    # Precompute (in plain JAX, tiny tensors):
    #   valid:   (T, B, 1) f32 -> layout-matched lane-broadcast mask
    #   inv_len: (B, 1)    f32 -> applied once at finalize (sum-then-divide,
    #                            matches PyTorch numerics)
    valid = jnp.logical_not(padding_mask).astype(jnp.float32)    # (T, B)
    inv_len = (1.0 / jnp.sum(valid, axis=0))[:, None]            # (B, 1)
    valid = valid[:, :, None]                                    # (T, B, 1)

    return pl.pallas_call(
        _masked_avg_pool_kernel,
        out_shape=jax.ShapeDtypeStruct((B, C), encoder_out.dtype),
        grid_spec=pltpu.PrefetchScalarGridSpec(
            num_scalar_prefetch=0,
            grid=grid,
            in_specs=[
                pl.BlockSpec((tile_t, B, tile_c), lambda c, t: (t, 0, c)),
                pl.BlockSpec((tile_t, B, 1), lambda c, t: (t, 0, 0)),
                pl.BlockSpec((B, 1), lambda c, t: (0, 0)),
            ],
            out_specs=pl.BlockSpec((B, tile_c), lambda c, t: (0, c)),
            scratch_shapes=[pltpu.VMEM((B, tile_c), jnp.float32)],
        ),
        compiler_params=compiler_params,
    )(encoder_out, valid, inv_len)


# ---------------------------------------------------------------------------
# Reference + tests
# ---------------------------------------------------------------------------

def _reference(x, padding_mask):
    valid = jnp.logical_not(padding_mask).astype(jnp.float32)
    total = (x.astype(jnp.float32) * valid[:, :, None]).sum(axis=0)
    return (total / valid.sum(axis=0)[:, None]).astype(x.dtype)


if __name__ == "__main__":
    key = jax.random.PRNGKey(0)
    k1, k2, k3, k4 = jax.random.split(key, 4)

    # --- Test 1: small masked case (T=8, B=2, C=32), single grid step -------
    T, B, C = 8, 2, 32
    x = jax.random.normal(k1, (T, B, C), dtype=jnp.float32)
    lengths = jax.random.randint(k2, (B,), minval=1, maxval=T + 1)
    padding_mask = jnp.arange(T)[:, None] >= lengths[None, :]   # (T, B)

    out = jax.block_until_ready(avg_pooler(x, padding_mask))
    ref = _reference(x, padding_mask)
    assert jnp.allclose(out, ref, atol=1e-5, rtol=1e-5), "masked mismatch"

    # --- Test 2: padding_mask=None fast path (plain mean over T) ------------
    out_none = jax.block_until_ready(avg_pooler(x, None))
    ref_none = x.mean(axis=0)
    assert jnp.allclose(out_none, ref_none, atol=1e-5, rtol=1e-5), \
        "no-mask mismatch"

    # --- Test 3: exercise the multi-step grid (T and C tiled) ---------------
    T2, B2, C2 = 24, 8, 256
    x2 = jax.random.normal(k3, (T2, B2, C2), dtype=jnp.float32)
    lengths2 = jax.random.randint(k4, (B2,), minval=1, maxval=T2 + 1)
    padding_mask2 = jnp.arange(T2)[:, None] >= lengths2[None, :]

    out2 = jax.block_until_ready(
        avg_pooler(x2, padding_mask2, tile_t=8, tile_c=128))  # grid (2, 3)
    ref2 = _reference(x2, padding_mask2)
    assert jnp.allclose(out2, ref2, atol=1e-5, rtol=1e-5), "tiled mismatch"

    out2_none = jax.block_until_ready(
        avg_pooler(x2, None, tile_t=8, tile_c=128))
    assert jnp.allclose(out2_none, x2.mean(axis=0), atol=1e-5, rtol=1e-5)

    # --- Test 4: bfloat16 input exercises f32 accumulate + cast-back --------
    x3 = x2.astype(jnp.bfloat16)
    out3 = jax.block_until_ready(avg_pooler(x3, padding_mask2))
    ref3 = _reference(x3, padding_mask2)
    assert jnp.allclose(out3.astype(jnp.float32), ref3.astype(jnp.float32),
                        atol=2e-2, rtol=2e-2), "bf16 mismatch"

    print("KERNEL_OK")
</pallas_src>

<mosaic_0001>
module attributes {stable_mosaic.version = 11 : i64} {
  func.func @_masked_avg_pool_kernel(%arg0: i32, %arg1: i32, %arg2: memref<8x2x32xf32, #tpu.memory_space<vmem>>, %arg3: memref<8x2x1xf32, #tpu.memory_space<vmem>>, %arg4: memref<2x1xf32, #tpu.memory_space<vmem>>, %arg5: memref<2x32xf32, #tpu.memory_space<vmem>>, %arg6: memref<2x32xf32, #tpu.memory_space<vmem>>) attributes {dimension_semantics = [#tpu.dimension_semantics<parallel>, #tpu.dimension_semantics<arbitrary>], iteration_bounds = array<i64: 1, 1>, scalar_prefetch = 0 : i64, scratch_operands = 1 : i64, tpu.core_type = #tpu.core_type<tc>, window_params = [{transform_indices = @transform_0, window_bounds = array<i64: 8, 2, 32>}, {transform_indices = @transform_1, window_bounds = array<i64: 8, 2, 1>}, {pipeline_mode = #tpu.pipeline_mode<synchronous>, transform_indices = @transform_2, window_bounds = array<i64: 2, 1>}, {transform_indices = @transform_3, window_bounds = array<i64: 2, 32>}]} {
    %c0_i32 = arith.constant 0 : i32
    %0 = arith.cmpi eq, %arg1, %c0_i32 : i32
    %1 = arith.extui %0 : i1 to i32
    %c0_i32_0 = arith.constant 0 : i32
    %2 = arith.cmpi ne, %1, %c0_i32_0 : i32
    scf.if %2 {
      %cst_14 = arith.constant 0.000000e+00 : f32
      %18 = vector.broadcast %cst_14 : f32 to vector<2x32xf32>
      %c0_15 = arith.constant 0 : index
      %c0_16 = arith.constant 0 : index
      %19 = vector.load %arg6[%c0_15, %c0_16] : memref<2x32xf32, #tpu.memory_space<vmem>>, vector<2x32xf32>
      tpu.vector_store %arg6[%c0_15, %c0_16], %18 {strides = array<i32>} : memref<2x32xf32, #tpu.memory_space<vmem>>, vector<2x32xf32>,
    } else {
    }
    %c0 = arith.constant 0 : index
    %c0_1 = arith.constant 0 : index
    %c0_2 = arith.constant 0 : index
    %3 = vector.load %arg2[%c0, %c0_1, %c0_2] : memref<8x2x32xf32, #tpu.memory_space<vmem>>, vector<8x2x32xf32>
    %c0_3 = arith.constant 0 : index
    %c0_4 = arith.constant 0 : index
    %c0_5 = arith.constant 0 : index
    %4 = vector.load %arg3[%c0_3, %c0_4, %c0_5] : memref<8x2x1xf32, #tpu.memory_space<vmem>>, vector<8x2x1xf32>
    %cst = arith.constant 0.000000e+00 : f32
    %5 = vector.broadcast %cst : f32 to vector<8x2x1xf32>
    %6 = arith.cmpf one, %4, %5 : vector<8x2x1xf32>
    %cst_6 = arith.constant 0.000000e+00 : f32
    %7 = vector.shape_cast %6 : vector<8x2x1xi1> to vector<8x2x1xi1>
    %8 = vector.broadcast %7 : vector<8x2x1xi1> to vector<8x2x32xi1>
    %9 = vector.broadcast %cst_6 : f32 to vector<8x2x32xf32>
    %10 = arith.select %8, %3, %9 : vector<8x2x32xi1>, vector<8x2x32xf32>
    %c0_7 = arith.constant 0 : index
    %c0_8 = arith.constant 0 : index
    %11 = vector.load %arg6[%c0_7, %c0_8] : memref<2x32xf32, #tpu.memory_space<vmem>>, vector<2x32xf32>
    %cst_9 = arith.constant dense<0.000000e+00> : vector<2x32xf32>
    %12 = vector.multi_reduction <add>, %10, %cst_9 [0] : vector<8x2x32xf32> to vector<2x32xf32>
    %13 = arith.addf %11, %12 : vector<2x32xf32>
    %c0_10 = arith.constant 0 : index
    %c0_11 = arith.constant 0 : index
    %14 = vector.load %arg6[%c0_10, %c0_11] : memref<2x32xf32, #tpu.memory_space<vmem>>, vector<2x32xf32>
    tpu.vector_store %arg6[%c0_10, %c0_11], %13 {strides = array<i32>} : memref<2x32xf32, #tpu.memory_space<vmem>>, vector<2x32xf32>,
    %c0_i32_12 = arith.constant 0 : i32
    %15 = arith.cmpi eq, %arg1, %c0_i32_12 : i32
    %16 = arith.extui %15 : i1 to i32
    %c0_i32_13 = arith.constant 0 : i32
    %17 = arith.cmpi ne, %16, %c0_i32_13 : i32
    scf.if %17 {
      %c0_14 = arith.constant 0 : index
      %c0_15 = arith.constant 0 : index
      %18 = vector.load %arg6[%c0_14, %c0_15] : memref<2x32xf32, #tpu.memory_space<vmem>>, vector<2x32xf32>
      %c0_16 = arith.constant 0 : index
      %c0_17 = arith.constant 0 : index
      %19 = vector.load %arg4[%c0_16, %c0_17] : memref<2x1xf32, #tpu.memory_space<vmem>>, vector<2x1xf32>
      %20 = vector.broadcast %19 : vector<2x1xf32> to vector<2x32xf32>
      %21 = arith.mulf %18, %20 : vector<2x32xf32>
      %c0_18 = arith.constant 0 : index
      %c0_19 = arith.constant 0 : index
      %22 = vector.load %arg5[%c0_18, %c0_19] : memref<2x32xf32, #tpu.memory_space<vmem>>, vector<2x32xf32>
      tpu.vector_store %arg5[%c0_18, %c0_19], %21 {strides = array<i32>} : memref<2x32xf32, #tpu.memory_space<vmem>>, vector<2x32xf32>,
    } else {
    }
    return
  }
  func.func @transform_0(%arg0: i32, %arg1: i32) -> (i32, i32, i32) {
    %c0_i32 = arith.constant 0 : i32
    %c0_i32_0 = arith.constant 0 : i32
    return %arg1, %c0_i32, %arg0 : i32, i32, i32
  }
  func.func @transform_1(%arg0: i32, %arg1: i32) -> (i32, i32, i32) {
    %c0_i32 = arith.constant 0 : i32
    %c0_i32_0 = arith.constant 0 : i32
    %c0_i32_1 = arith.constant 0 : i32
    return %arg1, %c0_i32, %c0_i32_0 : i32, i32, i32
  }
  func.func @transform_2(%arg0: i32, %arg1: i32) -> (i32, i32) {
    %c0_i32 = arith.constant 0 : i32
    %c0_i32_0 = arith.constant 0 : i32
    %c0_i32_1 = arith.constant 0 : i32
    return %c0_i32, %c0_i32_0 : i32, i32
  }
  func.func @transform_3(%arg0: i32, %arg1: i32) -> (i32, i32) {
    %c0_i32 = arith.constant 0 : i32
    %c0_i32_0 = arith.constant 0 : i32
    return %c0_i32, %arg0 : i32, i32
  }
}

</mosaic_0001>

<llo_original>
// kernel: tpu_custom_call.1
$region0: #{tpu_custom_call.1}
  #allocation0 [shape = 'u32[]', space=smem, size = 0x4, offset = 0x4, fixed_abs, tag = 'smem constant byte address 0x4 - core index']
  #allocation1 [shape = 'u32[144,128]{1,0:T(1,128)}', space=vmem, size = 0x12000, scoped, tag = 'internal scratch']
  #allocation2 [shape = 'f32[2,32]{1,0:T(2,128)}', space=vmem, size = 0x400, scoped, tag = 'scratch operand']
  %s0 = inlined_call_operand.vmem [shape: f32[8,2,32], index: 0, kind: input, shape index: {}]
  %s1 = inlined_call_operand.vmem [shape: f32[8,2,1], index: 1, kind: input, shape index: {}]
  %s2 = inlined_call_operand.vmem [shape: f32[2,1], index: 2, kind: input, shape index: {}]
  %s3 = inlined_call_operand.hbm [shape: f32[2,32], index: 3, kind: output, shape index: {}]
  %s4 = sld [smem:[#allocation0]]
  $region30: #{tpu_custom_call.1} parent=0
    _
  %s6 = ssub.s32 1, %s4
  %s7 = scalar_select 0, %s6, %s4
  $region1: #{tpu_custom_call.1} parent=0
    #allocation3 [shape = 'u8[1024]{0}', space=vmem, size = 0x400, scoped, tag = 'output window, operand 0, single buffered']
    #allocation4 [shape = 's32[1]{0}', space=sflag, size = 0x4, scoped, tag = 'scoped memory for tpu_custom_call.1']
    %8 = vsyncpa [#allocation4], 0
    // Predicated region
    $region2: #{tpu_custom_call.1} parent=1 // pred_check
      _
    $region3: #{tpu_custom_call.1} parent=1 // pred_check_branch
      %10 = sbr.rel (0) target = $region5
    $region4: #{tpu_custom_call.1} parent=1 // pred_region
      _
    $region5: #{tpu_custom_call.1} parent=1 // pred_fallthru
      _
    // Predicated region
    $region6: #{tpu_custom_call.1} parent=1 // pred_check
      _
    $region7: #{tpu_custom_call.1} parent=1 // pred_check_branch
      %12 = sbr.rel (0) target = $region9
    $region8: #{tpu_custom_call.1} parent=1 // pred_region
      _
    $region9: #{tpu_custom_call.1} parent=1 // pred_fallthru
      _
    // Predicated region
    $region10: #{tpu_custom_call.1} parent=1 // pred_check
      _
    $region11: #{tpu_custom_call.1} parent=1 // pred_check_branch
      %14 = sbr.rel (0) target = $region13
    $region12: #{tpu_custom_call.1} parent=1 // pred_region
      _
    $region13: #{tpu_custom_call.1} parent=1 // pred_fallthru
      _
    %p15 = scmp.eq.s32.totalorder 0, 0
    // Predicated region
    $region14: #{tpu_custom_call.1} parent=1 // pred_check
      %p16 = pneg %p15
    $region15: #{tpu_custom_call.1} parent=1 // pred_check_branch
      %18 = sbr.rel (%p16) target = $region17
    $region16: #{tpu_custom_call.1} parent=1 // pred_region
      %vm19 = vcmask 254976
      %20 = vst.msk [vmem:[#allocation2] sm:$0x3] %vm19, 0.0
    $region17: #{tpu_custom_call.1} parent=1 // pred_fallthru
      _
    %v21 = vld [vmem:[%s0] sm:$0x3]
    %v22 = vld [vmem:[%s0 + $0x2] sm:$0x3]
    %v23 = vld [vmem:[%s0 + $0x4] sm:$0x3]
    %v24 = vld [vmem:[%s0 + $0x6] sm:$0x3]
    %v25 = vld [vmem:[%s0 + $0x8] sm:$0x3]
    %v26 = vld [vmem:[%s0 + $0xa] sm:$0x3]
    %v27 = vld [vmem:[%s0 + $0xc] sm:$0x3]
    %v28 = vld [vmem:[%s0 + $0xe] sm:$0x3]
    %v29 = vld [vmem:[%s1] sm:$0x3]
    %v30 = vld [vmem:[%s1 + $0x2] sm:$0x3]
    %v31 = vld [vmem:[%s1 + $0x4] sm:$0x3]
    %v32 = vld [vmem:[%s1 + $0x6] sm:$0x3]
    %v33 = vld [vmem:[%s1 + $0x8] sm:$0x3]
    %v34 = vld [vmem:[%s1 + $0xa] sm:$0x3]
    %v35 = vld [vmem:[%s1 + $0xc] sm:$0x3]
    %v36 = vld [vmem:[%s1 + $0xe] sm:$0x3]
    %vm37 = vcmp.ne.f32.partialorder %v29, 0.0
    %vm38 = vcmp.ne.f32.partialorder %v30, 0.0
    %vm39 = vcmp.ne.f32.partialorder %v31, 0.0
    %vm40 = vcmp.ne.f32.partialorder %v32, 0.0
    %vm41 = vcmp.ne.f32.partialorder %v33, 0.0
    %vm42 = vcmp.ne.f32.partialorder %v34, 0.0
    %vm43 = vcmp.ne.f32.partialorder %v35, 0.0
    %vm44 = vcmp.ne.f32.partialorder %v36, 0.0
    %v45 = vsel %vm37, 1, 0
    %v46 = vsel %vm38, 1, 0
    %v47 = vsel %vm39, 1, 0
    %v48 = vsel %vm40, 1, 0
    %v49 = vsel %vm41, 1, 0
    %v50 = vsel %vm42, 1, 0
    %v51 = vsel %vm43, 1, 0
    %v52 = vsel %vm44, 1, 0
    %53 = vset.pattern.permute.xlu0 0
    %54 = vperm.xlu0 %53, %v45
    %v55 = vpop.permute.xlu0 %54
    %56 = vset.pattern.permute.xlu0 0
    %57 = vperm.xlu0 %56, %v46
    %v58 = vpop.permute.xlu0 %57
    %59 = vset.pattern.permute.xlu0 0
    %60 = vperm.xlu0 %59, %v47
    %v61 = vpop.permute.xlu0 %60
    %62 = vset.pattern.permute.xlu0 0
    %63 = vperm.xlu0 %62, %v48
    %v64 = vpop.permute.xlu0 %63
    %65 = vset.pattern.permute.xlu0 0
    %66 = vperm.xlu0 %65, %v49
    %v67 = vpop.permute.xlu0 %66
    %68 = vset.pattern.permute.xlu0 0
    %69 = vperm.xlu0 %68, %v50
    %v70 = vpop.permute.xlu0 %69
    %71 = vset.pattern.permute.xlu0 0
    %72 = vperm.xlu0 %71, %v51
    %v73 = vpop.permute.xlu0 %72
    %74 = vset.pattern.permute.xlu0 0
    %75 = vperm.xlu0 %74, %v52
    %v76 = vpop.permute.xlu0 %75
    %vm77 = vcmp.eq.s32.totalorder %v55, 1
    %vm78 = vcmp.eq.s32.totalorder %v58, 1
    %vm79 = vcmp.eq.s32.totalorder %v61, 1
    %vm80 = vcmp.eq.s32.totalorder %v64, 1
    %vm81 = vcmp.eq.s32.totalorder %v67, 1
    %vm82 = vcmp.eq.s32.totalorder %v70, 1
    %vm83 = vcmp.eq.s32.totalorder %v73, 1
    %vm84 = vcmp.eq.s32.totalorder %v76, 1
    %v85 = vsel %vm77, %v21, 0.0
    %v86 = vsel %vm78, %v22, 0.0
    %v87 = vsel %vm79, %v23, 0.0
    %v88 = vsel %vm80, %v24, 0.0
    %v89 = vsel %vm81, %v25, 0.0
    %v90 = vsel %vm82, %v26, 0.0
    %v91 = vsel %vm83, %v27, 0.0
    %v92 = vsel %vm84, %v28, 0.0
    %v93 = vld [vmem:[#allocation2] sm:$0x3]
    %vm94 = vcmask 254976
    %v95 = vsel %vm94, %v85, 0.0
    %v96 = vsel %vm94, %v86, 0.0
    %v97 = vadd.f32 %v95, %v96
    %v98 = vsel %vm94, %v87, 0.0
    %v99 = vadd.f32 %v97, %v98
    %v100 = vsel %vm94, %v88, 0.0
    %v101 = vadd.f32 %v99, %v100
    %v102 = vsel %vm94, %v89, 0.0
    %v103 = vadd.f32 %v101, %v102
    %v104 = vsel %vm94, %v90, 0.0
    %v105 = vadd.f32 %v103, %v104
    %v106 = vsel %vm94, %v91, 0.0
    %v107 = vadd.f32 %v105, %v106
    %v108 = vsel %vm94, %v92, 0.0
    %v109 = vadd.f32 %v107, %v108
    %v110 = vadd.f32 %v93, %v109
    %111 = vst.msk [vmem:[#allocation2] sm:$0x3] %vm94, %v110
    // Predicated region
    $region18: #{tpu_custom_call.1} parent=1 // pred_check
      %p112 = pneg %p15
    $region19: #{tpu_custom_call.1} parent=1 // pred_check_branch
      %114 = sbr.rel (%p112) target = $region21
    $region20: #{tpu_custom_call.1} parent=1 // pred_region
      %v115 = vld [vmem:[#allocation2] sm:$0x3]
      %v116 = vld [vmem:[%s2] sm:$0x3]
      %118 = vset.pattern.permute.xlu0 0
      %119 = vperm.xlu0 %118, %v116
      %v120 = vpop.permute.xlu0 %119
      %v122 = vmul.f32 %v115, %v120
      %123 = vst.msk [vmem:[#allocation3] sm:$0x3] %vm94, %v122
    $region21: #{tpu_custom_call.1} parent=1 // pred_fallthru
      _
    // Predicated region
    $region22: #{tpu_custom_call.1} parent=1 // pred_check
      _
    $region23: #{tpu_custom_call.1} parent=1 // pred_check_branch
      %125 = sbr.rel (0) target = $region25
    $region24: #{tpu_custom_call.1} parent=1 // pred_region
      %s127 = ssub.s32 32, 32
      %128 = vsyncadd [#allocation4], %s127
      %s130 = sshll.u32 [#allocation3], 4
      %s131 = int_to_ptr.vmem [resolvable:$true] %s130
      %133 = dma.vmem_to_hbm [thread:$0]  %s131, 32, %s3, [#allocation4]
    $region25: #{tpu_custom_call.1} parent=1 // pred_fallthru
      _
    // Predicated region
    $region26: #{tpu_custom_call.1} parent=1 // pred_check
      _
    $region27: #{tpu_custom_call.1} parent=1 // pred_check_branch
      %135 = sbr.rel (0) target = $region29
    $region28: #{tpu_custom_call.1} parent=1 // pred_region
      %136 = dma.done [#allocation4], 32
    $region29: #{tpu_custom_call.1} parent=1 // pred_fallthru
      _
    %137 = vsyncpa [#allocation4], 1

</llo_original>
